<compile_context>
chip_gen: v5e
topology: v5e:2x2
jax: 0.10.0
libtpu: 0.0.40
codegen_flags: <defaults>
</compile_context>

<pallas_src>
import math
from functools import partial

import numpy as np
import jax
import jax.numpy as jnp
from jax import lax
from jax.experimental import pallas as pl
from jax.experimental.pallas import tpu as pltpu


def _round_up(a, m):
    return -(-a // m) * m


def _convt1d_kernel(x0_ref, x1_ref, w_ref, b_ref, o_ref, xbuf_ref, *,
                    taps_by_phase, groups):
    """Polyphase ConvTranspose1d tile kernel (NCL layout, L on lanes).

    x0_ref, x1_ref : (1, C_in, T)   two adjacent L-tiles of the padded input window
                     (together they cover every static tap offset of this tile)
    w_ref          : (K, G, C_out_g, C_in_g)   per-tap, per-group weights (resident)
    b_ref          : (C_out, 1)
    o_ref          : (stride, 1, C_out, T)     phase-major, lane-dense output tile
    xbuf_ref       : (C_in, 2*T) VMEM scratch  contiguous window for tap slicing
    """
    T = x0_ref.shape[-1]
    G = groups
    C_out_g = w_ref.shape[2]
    C_in_g = w_ref.shape[3]

    # Stitch the two tiles into one lane-contiguous window (aligned 128-lane stores).
    xbuf_ref[:, :T] = x0_ref[0]
    xbuf_ref[:, T:] = x1_ref[0]

    for r, taps in enumerate(taps_by_phase):
        # Per-phase f32 accumulators; tile sizing keeps C_out * T * 4B <= ~128 KiB.
        accs = [
            jnp.broadcast_to(
                b_ref[g * C_out_g:(g + 1) * C_out_g, :].astype(jnp.float32),
                (C_out_g, T))
            for g in range(G)
        ]
        for (k, off) in taps:                    # static python loop over this phase's taps
            xk = xbuf_ref[:, off:off + T]        # (C_in, T), static lane offset
            for g in range(G):                   # per-group MXU matmul (no block-diagonal)
                accs[g] = accs[g] + jnp.dot(
                    w_ref[k, g],
                    xk[g * C_in_g:(g + 1) * C_in_g, :],
                    preferred_element_type=jnp.float32)
        val = accs[0] if G == 1 else jnp.concatenate(accs, axis=0)   # (C_out, T)
        o_ref[r, 0] = val.astype(o_ref.dtype)


def conv_transpose1d(x, weight, bias=None, *, stride=1, padding=0,
                     output_padding=0, groups=1, dilation=1,
                     compute_dtype=None, tile_t=512):
    """Matches F.conv_transpose1d(x, weight, bias, stride, padding, output_padding,
    groups, dilation).

    x      : (N, C_in, L_in)            (PyTorch NCL layout)
    weight : (C_in, C_out // groups, K)
    bias   : (C_out,) or None
    compute_dtype : optional MXU operand dtype (e.g. jnp.bfloat16); accumulation stays
                    f32 and the output keeps x.dtype.
    """
    N, C_in, L_in = x.shape
    C_in_w, C_out_g, K = weight.shape
    if C_in_w != C_in:
        raise ValueError("weight / in_channels mismatch")
    if C_in % groups != 0:
        raise ValueError("in_channels must be divisible by groups")
    if output_padding >= stride and output_padding >= dilation:
        raise ValueError("output_padding must be smaller than either stride or dilation")
    C_out = C_out_g * groups
    C_in_g = C_in // groups
    L_out = (L_in - 1) * stride - 2 * padding + dilation * (K - 1) + output_padding + 1

    # ---- static polyphase tap table ----------------------------------------------
    # Output lo = t*stride + r gets tap k iff r == (k*dilation - padding) % stride,
    # reading x[li] with li = t + o_k, o_k = (r + padding - k*dilation) / stride.
    taps_by_phase = [[] for _ in range(stride)]
    offs = []
    for k in range(K):
        r = (k * dilation - padding) % stride
        o = (r + padding - k * dilation) // stride          # exact integer
        offs.append(o)
        taps_by_phase[r].append((k, o))
    min_o, max_o = min(offs), max(offs)
    span = max_o - min_o

    # ---- tile size: lane-dense (x128), bounded acc & VMEM (v7x-safe) --------------
    T_full = -(-L_out // stride)                  # outputs per phase (upper bound)
    min_tile = max(128, _round_up(span, 128))
    tile = max(128, min(_round_up(tile_t, 128), _round_up(T_full, 128)))
    while tile - 128 >= min_tile and C_out * tile * 4 > 128 * 1024:
        tile -= 128
    tile = max(tile, min_tile)
    num_tiles = -(-T_full // tile)
    T_pad = num_tiles * tile

    # ---- un-stuffed input window: x_work[:, :, j] = x[:, :, j + min_o] (0 outside) --
    L_need = (num_tiles + 1) * tile               # room for each tile's 2 adjacent blocks
    left_pad = max(0, -min_o)
    right_pad = max(0, L_need + min_o - L_in)
    start = min_o + left_pad
    x_work = jnp.pad(x, ((0, 0), (0, 0), (left_pad, right_pad)))[:, :, start:start + L_need]

    # rebase tap offsets into the window (all >= 0, <= span)
    taps_static = tuple(tuple((k, o - min_o) for (k, o) in taps) for taps in taps_by_phase)

    # ---- weights (K, G, C_out_g, C_in_g); bias as a (C_out, 1) column --------------
    w_arr = jnp.transpose(weight.reshape(groups, C_in_g, C_out_g, K), (3, 0, 2, 1))
    b_col = (bias if bias is not None else jnp.zeros((C_out,), x.dtype))
    b_col = b_col.reshape(C_out, 1).astype(x.dtype)

    if compute_dtype is not None:
        x_work = x_work.astype(compute_dtype)
        w_arr = w_arr.astype(compute_dtype)
    in_dt = jnp.dtype(x_work.dtype)
    out_dt = jnp.dtype(x.dtype)

    # ---- VMEM budget & cost hints ---------------------------------------------------
    vmem_est = (2 * 2 * C_in * tile * in_dt.itemsize          # two x specs, double-buffered
                + 2 * stride * C_out * tile * out_dt.itemsize  # output, double-buffered
                + 2 * int(w_arr.size) * in_dt.itemsize + C_out * 4
                + C_out * tile * 4                             # f32 accumulators
                + 2 * C_in * tile * in_dt.itemsize)            # xbuf scratch
    vmem_limit = int(min(64 << 20, max(32 << 20, 2 * vmem_est)))
    flops = 2 * N * T_pad * K * groups * C_out_g * C_in_g
    bytes_accessed = (2 * int(x_work.size) * in_dt.itemsize
                      + int(w_arr.size) * in_dt.itemsize + C_out * 4
                      + stride * N * C_out * T_pad * out_dt.itemsize)

    y = pl.pallas_call(
        partial(_convt1d_kernel, taps_by_phase=taps_static, groups=groups),
        out_shape=jax.ShapeDtypeStruct((stride, N, C_out, T_pad), x.dtype),
        grid=(N, num_tiles),
        in_specs=[
            pl.BlockSpec((1, C_in, tile), lambda n, t: (n, 0, t)),
            pl.BlockSpec((1, C_in, tile), lambda n, t: (n, 0, t + 1)),
            pl.BlockSpec((K, groups, C_out_g, C_in_g), lambda n, t: (0, 0, 0, 0)),
            pl.BlockSpec((C_out, 1), lambda n, t: (0, 0)),
        ],
        out_specs=pl.BlockSpec((stride, 1, C_out, tile), lambda n, t: (0, n, 0, t)),
        scratch_shapes=[pltpu.VMEM((C_in, 2 * tile), x_work.dtype)],
        compiler_params=pltpu.CompilerParams(
            dimension_semantics=("parallel", "parallel"),
            vmem_limit_bytes=vmem_limit),
        cost_estimate=pl.CostEstimate(flops=flops, transcendentals=0,
                                      bytes_accessed=bytes_accessed),
    )(x_work, x_work, w_arr, b_col)

    # interleave phases:  out[n, c, t*stride + r] = y[r, n, c, t]
    out = jnp.transpose(y, (1, 2, 3, 0)).reshape(N, C_out, T_pad * stride)
    return out[:, :, :L_out]


def _ref_conv_transpose1d(x, w, b, *, stride, padding, output_padding, groups, dilation):
    """Naive scatter reference (numpy) matching PyTorch semantics."""
    x = np.asarray(x, np.float64)
    w = np.asarray(w, np.float64)
    b = np.asarray(b, np.float64)
    N, C_in, L_in = x.shape
    _, C_out_g, K = w.shape
    C_out = C_out_g * groups
    C_in_g = C_in // groups
    L_out = (L_in - 1) * stride - 2 * padding + dilation * (K - 1) + output_padding + 1
    y = np.zeros((N, C_out, L_out), np.float64) + b[None, :, None]
    for n in range(N):
        for g in range(groups):
            for ci_l in range(C_in_g):
                ci = g * C_in_g + ci_l
                for co_l in range(C_out_g):
                    co = g * C_out_g + co_l
                    for li in range(L_in):
                        for k in range(K):
                            lo = li * stride - padding + k * dilation
                            if 0 <= lo < L_out:
                                y[n, co, lo] += x[n, ci, li] * w[ci, co_l, k]
    return y


if __name__ == "__main__":
    key = jax.random.PRNGKey(0)

    def make_case(case_key, N, C_in, C_out, K, L_in, groups):
        kx, kw, kb = jax.random.split(case_key, 3)
        C_out_g = C_out // groups
        # kaiming_uniform_(a=sqrt(5)) => U(-1/sqrt(fan_in), 1/sqrt(fan_in)),
        # fan_in = (out_channels // groups) * kernel_size for transposed weight.
        bound = 1.0 / math.sqrt(C_out_g * K)
        w = jax.random.uniform(kw, (C_in, C_out_g, K), jnp.float32, -bound, bound)
        b = jax.random.uniform(kb, (C_out,), jnp.float32, -bound, bound)
        x = jax.random.normal(kx, (N, C_in, L_in), jnp.float32)
        return x, w, b

    k1, k2 = jax.random.split(key)

    # Case 1: module config exercising stride / padding / output_padding / dilation /
    # groups / bias (includes an empty polyphase phase: even outputs get bias only).
    x, w, b = make_case(k1, N=2, C_in=4, C_out=6, K=3, L_in=16, groups=2)
    args1 = dict(stride=2, padding=1, output_padding=1, groups=2, dilation=2)
    y = jax.block_until_ready(conv_transpose1d(x, w, b, **args1))
    y_ref = _ref_conv_transpose1d(x, w, b, **args1)
    assert y.shape == y_ref.shape, (y.shape, y_ref.shape)
    np.testing.assert_allclose(np.asarray(y), y_ref, rtol=1e-4, atol=1e-5)

    # Case 1 again with bf16 MXU operands (f32 accumulation) -> loose tolerance.
    y_bf16 = jax.block_until_ready(
        conv_transpose1d(x, w, b, compute_dtype=jnp.bfloat16, **args1))
    np.testing.assert_allclose(np.asarray(y_bf16), y_ref, rtol=5e-2, atol=5e-2)

    # Case 2: stride=3 (three phases, one with two taps), groups=1, no dilation.
    x2, w2, b2 = make_case(k2, N=2, C_in=8, C_out=16, K=4, L_in=10, groups=1)
    args2 = dict(stride=3, padding=0, output_padding=2, groups=1, dilation=1)
    y2 = jax.block_until_ready(conv_transpose1d(x2, w2, b2, **args2))
    y2_ref = _ref_conv_transpose1d(x2, w2, b2, **args2)
    assert y2.shape == y2_ref.shape, (y2.shape, y2_ref.shape)
    np.testing.assert_allclose(np.asarray(y2), y2_ref, rtol=1e-4, atol=1e-5)

    print("KERNEL_OK")
</pallas_src>

<mosaic_0001>
module attributes {stable_mosaic.version = 11 : i64} {
  func.func @_convt1d_kernel(%arg0: i32, %arg1: i32, %arg2: memref<1x4x128xf32, #tpu.memory_space<vmem>>, %arg3: memref<1x4x128xf32, #tpu.memory_space<vmem>>, %arg4: memref<3x2x3x2xf32, #tpu.memory_space<vmem>>, %arg5: memref<6x1xf32, #tpu.memory_space<vmem>>, %arg6: memref<2x1x6x128xf32, #tpu.memory_space<vmem>>, %arg7: memref<4x256xf32, #tpu.memory_space<vmem>>) attributes {dimension_semantics = [#tpu.dimension_semantics<parallel>, #tpu.dimension_semantics<parallel>], iteration_bounds = array<i64: 2, 1>, scalar_prefetch = 0 : i64, scratch_operands = 1 : i64, tpu.core_type = #tpu.core_type<tc>, window_params = [{transform_indices = @transform_0, window_bounds = array<i64: 1, 4, 128>}, {transform_indices = @transform_1, window_bounds = array<i64: 1, 4, 128>}, {pipeline_mode = #tpu.pipeline_mode<synchronous>, transform_indices = @transform_2, window_bounds = array<i64: 3, 2, 3, 2>}, {pipeline_mode = #tpu.pipeline_mode<synchronous>, transform_indices = @transform_3, window_bounds = array<i64: 6, 1>}, {transform_indices = @transform_4, window_bounds = array<i64: 2, 1, 6, 128>}]} {
    %c0 = arith.constant 0 : index
    %c0_0 = arith.constant 0 : index
    %c0_1 = arith.constant 0 : index
    %0 = vector.load %arg2[%c0, %c0_0, %c0_1] : memref<1x4x128xf32, #tpu.memory_space<vmem>>, vector<1x4x128xf32>
    %1 = vector.shape_cast %0 : vector<1x4x128xf32> to vector<4x128xf32>
    %c0_2 = arith.constant 0 : index
    %c0_3 = arith.constant 0 : index
    %2 = vector.load %arg7[%c0_2, %c0_3] : memref<4x256xf32, #tpu.memory_space<vmem>>, vector<4x128xf32>
    tpu.vector_store %arg7[%c0_2, %c0_3], %1 {strides = array<i32>} : memref<4x256xf32, #tpu.memory_space<vmem>>, vector<4x128xf32>,
    %c0_4 = arith.constant 0 : index
    %c0_5 = arith.constant 0 : index
    %c0_6 = arith.constant 0 : index
    %3 = vector.load %arg3[%c0_4, %c0_5, %c0_6] : memref<1x4x128xf32, #tpu.memory_space<vmem>>, vector<1x4x128xf32>
    %4 = vector.shape_cast %3 : vector<1x4x128xf32> to vector<4x128xf32>
    %c0_7 = arith.constant 0 : index
    %c128 = arith.constant 128 : index
    %5 = vector.load %arg7[%c0_7, %c128] : memref<4x256xf32, #tpu.memory_space<vmem>>, vector<4x128xf32>
    tpu.vector_store %arg7[%c0_7, %c128], %4 {strides = array<i32>} : memref<4x256xf32, #tpu.memory_space<vmem>>, vector<4x128xf32>,
    %c0_8 = arith.constant 0 : index
    %c0_9 = arith.constant 0 : index
    %6 = vector.load %arg5[%c0_8, %c0_9] : memref<6x1xf32, #tpu.memory_space<vmem>>, vector<3x1xf32>
    %7 = vector.shape_cast %6 : vector<3x1xf32> to vector<3x1xf32>
    %8 = vector.broadcast %7 : vector<3x1xf32> to vector<3x128xf32>
    %c3 = arith.constant 3 : index
    %c0_10 = arith.constant 0 : index
    %9 = vector.load %arg5[%c3, %c0_10] : memref<6x1xf32, #tpu.memory_space<vmem>>, vector<3x1xf32>
    %10 = vector.shape_cast %9 : vector<3x1xf32> to vector<3x1xf32>
    %11 = vector.broadcast %10 : vector<3x1xf32> to vector<3x128xf32>
    %12 = tpu.concatenate %8, %11 in 0 : vector<3x128xf32>, vector<3x128xf32> -> vector<6x128xf32>
    %c0_11 = arith.constant 0 : index
    %c0_12 = arith.constant 0 : index
    %c0_13 = arith.constant 0 : index
    %c0_14 = arith.constant 0 : index
    %13 = vector.load %arg6[%c0_11, %c0_12, %c0_13, %c0_14] : memref<2x1x6x128xf32, #tpu.memory_space<vmem>>, vector<1x1x6x128xf32>
    %14 = vector.shape_cast %13 : vector<1x1x6x128xf32> to vector<6x128xf32>
    %15 = vector.shape_cast %12 : vector<6x128xf32> to vector<1x1x6x128xf32>
    tpu.vector_store %arg6[%c0_11, %c0_12, %c0_13, %c0_14], %15 {strides = array<i32>} : memref<2x1x6x128xf32, #tpu.memory_space<vmem>>, vector<1x1x6x128xf32>,
    %c0_15 = arith.constant 0 : index
    %c0_16 = arith.constant 0 : index
    %16 = vector.load %arg5[%c0_15, %c0_16] : memref<6x1xf32, #tpu.memory_space<vmem>>, vector<3x1xf32>
    %17 = vector.shape_cast %16 : vector<3x1xf32> to vector<3x1xf32>
    %18 = vector.broadcast %17 : vector<3x1xf32> to vector<3x128xf32>
    %c3_17 = arith.constant 3 : index
    %c0_18 = arith.constant 0 : index
    %19 = vector.load %arg5[%c3_17, %c0_18] : memref<6x1xf32, #tpu.memory_space<vmem>>, vector<3x1xf32>
    %20 = vector.shape_cast %19 : vector<3x1xf32> to vector<3x1xf32>
    %21 = vector.broadcast %20 : vector<3x1xf32> to vector<3x128xf32>
    %c0_19 = arith.constant 0 : index
    %c2 = arith.constant 2 : index
    %22 = vector.load %arg7[%c0_19, %c2] : memref<4x256xf32, #tpu.memory_space<vmem>>, vector<4x128xf32>
    %c0_20 = arith.constant 0 : index
    %c0_21 = arith.constant 0 : index
    %c0_22 = arith.constant 0 : index
    %c0_23 = arith.constant 0 : index
    %23 = vector.load %arg4[%c0_20, %c0_21, %c0_22, %c0_23] : memref<3x2x3x2xf32, #tpu.memory_space<vmem>>, vector<1x1x3x2xf32>
    %24 = vector.shape_cast %23 : vector<1x1x3x2xf32> to vector<3x2xf32>
    %25 = vector.extract_strided_slice %22 {offsets = [0, 0], sizes = [2, 128], strides = [1, 1]} : vector<4x128xf32> to vector<2x128xf32>
    %cst = arith.constant dense<0.000000e+00> : vector<3x128xf32>
    %26 = tpu.matmul %24, %25, %cst {dimension_numbers = #tpu.dot_dimension_numbers<[1], [0], [0], [1], [0, 0, 1, 1], [], []>} : vector<3x2xf32>, vector<2x128xf32>, vector<3x128xf32> -> vector<3x128xf32>
    %27 = arith.addf %18, %26 : vector<3x128xf32>
    %c0_24 = arith.constant 0 : index
    %c1 = arith.constant 1 : index
    %c0_25 = arith.constant 0 : index
    %c0_26 = arith.constant 0 : index
    %28 = vector.load %arg4[%c0_24, %c1, %c0_25, %c0_26] : memref<3x2x3x2xf32, #tpu.memory_space<vmem>>, vector<1x1x3x2xf32>
    %29 = vector.shape_cast %28 : vector<1x1x3x2xf32> to vector<3x2xf32>
    %30 = vector.extract_strided_slice %22 {offsets = [2, 0], sizes = [2, 128], strides = [1, 1]} : vector<4x128xf32> to vector<2x128xf32>
    %cst_27 = arith.constant dense<0.000000e+00> : vector<3x128xf32>
    %31 = tpu.matmul %29, %30, %cst_27 {dimension_numbers = #tpu.dot_dimension_numbers<[1], [0], [0], [1], [0, 0, 1, 1], [], []>} : vector<3x2xf32>, vector<2x128xf32>, vector<3x128xf32> -> vector<3x128xf32>
    %32 = arith.addf %21, %31 : vector<3x128xf32>
    %c0_28 = arith.constant 0 : index
    %c1_29 = arith.constant 1 : index
    %33 = vector.load %arg7[%c0_28, %c1_29] : memref<4x256xf32, #tpu.memory_space<vmem>>, vector<4x128xf32>
    %c1_30 = arith.constant 1 : index
    %c0_31 = arith.constant 0 : index
    %c0_32 = arith.constant 0 : index
    %c0_33 = arith.constant 0 : index
    %34 = vector.load %arg4[%c1_30, %c0_31, %c0_32, %c0_33] : memref<3x2x3x2xf32, #tpu.memory_space<vmem>>, vector<1x1x3x2xf32>
    %35 = vector.shape_cast %34 : vector<1x1x3x2xf32> to vector<3x2xf32>
    %36 = vector.extract_strided_slice %33 {offsets = [0, 0], sizes = [2, 128], strides = [1, 1]} : vector<4x128xf32> to vector<2x128xf32>
    %cst_34 = arith.constant dense<0.000000e+00> : vector<3x128xf32>
    %37 = tpu.matmul %35, %36, %cst_34 {dimension_numbers = #tpu.dot_dimension_numbers<[1], [0], [0], [1], [0, 0, 1, 1], [], []>} : vector<3x2xf32>, vector<2x128xf32>, vector<3x128xf32> -> vector<3x128xf32>
    %38 = arith.addf %27, %37 : vector<3x128xf32>
    %c1_35 = arith.constant 1 : index
    %c1_36 = arith.constant 1 : index
    %c0_37 = arith.constant 0 : index
    %c0_38 = arith.constant 0 : index
    %39 = vector.load %arg4[%c1_35, %c1_36, %c0_37, %c0_38] : memref<3x2x3x2xf32, #tpu.memory_space<vmem>>, vector<1x1x3x2xf32>
    %40 = vector.shape_cast %39 : vector<1x1x3x2xf32> to vector<3x2xf32>
    %41 = vector.extract_strided_slice %33 {offsets = [2, 0], sizes = [2, 128], strides = [1, 1]} : vector<4x128xf32> to vector<2x128xf32>
    %cst_39 = arith.constant dense<0.000000e+00> : vector<3x128xf32>
    %42 = tpu.matmul %40, %41, %cst_39 {dimension_numbers = #tpu.dot_dimension_numbers<[1], [0], [0], [1], [0, 0, 1, 1], [], []>} : vector<3x2xf32>, vector<2x128xf32>, vector<3x128xf32> -> vector<3x128xf32>
    %43 = arith.addf %32, %42 : vector<3x128xf32>
    %c0_40 = arith.constant 0 : index
    %c0_41 = arith.constant 0 : index
    %44 = vector.load %arg7[%c0_40, %c0_41] : memref<4x256xf32, #tpu.memory_space<vmem>>, vector<4x128xf32>
    %c2_42 = arith.constant 2 : index
    %c0_43 = arith.constant 0 : index
    %c0_44 = arith.constant 0 : index
    %c0_45 = arith.constant 0 : index
    %45 = vector.load %arg4[%c2_42, %c0_43, %c0_44, %c0_45] : memref<3x2x3x2xf32, #tpu.memory_space<vmem>>, vector<1x1x3x2xf32>
    %46 = vector.shape_cast %45 : vector<1x1x3x2xf32> to vector<3x2xf32>
    %47 = vector.extract_strided_slice %44 {offsets = [0, 0], sizes = [2, 128], strides = [1, 1]} : vector<4x128xf32> to vector<2x128xf32>
    %cst_46 = arith.constant dense<0.000000e+00> : vector<3x128xf32>
    %48 = tpu.matmul %46, %47, %cst_46 {dimension_numbers = #tpu.dot_dimension_numbers<[1], [0], [0], [1], [0, 0, 1, 1], [], []>} : vector<3x2xf32>, vector<2x128xf32>, vector<3x128xf32> -> vector<3x128xf32>
    %49 = arith.addf %38, %48 : vector<3x128xf32>
    %c2_47 = arith.constant 2 : index
    %c1_48 = arith.constant 1 : index
    %c0_49 = arith.constant 0 : index
    %c0_50 = arith.constant 0 : index
    %50 = vector.load %arg4[%c2_47, %c1_48, %c0_49, %c0_50] : memref<3x2x3x2xf32, #tpu.memory_space<vmem>>, vector<1x1x3x2xf32>
    %51 = vector.shape_cast %50 : vector<1x1x3x2xf32> to vector<3x2xf32>
    %52 = vector.extract_strided_slice %44 {offsets = [2, 0], sizes = [2, 128], strides = [1, 1]} : vector<4x128xf32> to vector<2x128xf32>
    %cst_51 = arith.constant dense<0.000000e+00> : vector<3x128xf32>
    %53 = tpu.matmul %51, %52, %cst_51 {dimension_numbers = #tpu.dot_dimension_numbers<[1], [0], [0], [1], [0, 0, 1, 1], [], []>} : vector<3x2xf32>, vector<2x128xf32>, vector<3x128xf32> -> vector<3x128xf32>
    %54 = arith.addf %43, %53 : vector<3x128xf32>
    %55 = tpu.concatenate %49, %54 in 0 : vector<3x128xf32>, vector<3x128xf32> -> vector<6x128xf32>
    %c1_52 = arith.constant 1 : index
    %c0_53 = arith.constant 0 : index
    %c0_54 = arith.constant 0 : index
    %c0_55 = arith.constant 0 : index
    %56 = vector.load %arg6[%c1_52, %c0_53, %c0_54, %c0_55] : memref<2x1x6x128xf32, #tpu.memory_space<vmem>>, vector<1x1x6x128xf32>
    %57 = vector.shape_cast %56 : vector<1x1x6x128xf32> to vector<6x128xf32>
    %58 = vector.shape_cast %55 : vector<6x128xf32> to vector<1x1x6x128xf32>
    tpu.vector_store %arg6[%c1_52, %c0_53, %c0_54, %c0_55], %58 {strides = array<i32>} : memref<2x1x6x128xf32, #tpu.memory_space<vmem>>, vector<1x1x6x128xf32>,
    return
  }
  func.func @transform_0(%arg0: i32, %arg1: i32) -> (i32, i32, i32) {
    %c0_i32 = arith.constant 0 : i32
    %c0_i32_0 = arith.constant 0 : i32
    return %arg0, %c0_i32, %arg1 : i32, i32, i32
  }
  func.func @transform_1(%arg0: i32, %arg1: i32) -> (i32, i32, i32) {
    %c1_i32 = arith.constant 1 : i32
    %0 = arith.addi %arg1, %c1_i32 : i32
    %c0_i32 = arith.constant 0 : i32
    %c0_i32_0 = arith.constant 0 : i32
    return %arg0, %c0_i32, %0 : i32, i32, i32
  }
  func.func @transform_2(%arg0: i32, %arg1: i32) -> (i32, i32, i32, i32) {
    %c0_i32 = arith.constant 0 : i32
    %c0_i32_0 = arith.constant 0 : i32
    %c0_i32_1 = arith.constant 0 : i32
    %c0_i32_2 = arith.constant 0 : i32
    %c0_i32_3 = arith.constant 0 : i32
    return %c0_i32, %c0_i32_0, %c0_i32_1, %c0_i32_2 : i32, i32, i32, i32
  }
  func.func @transform_3(%arg0: i32, %arg1: i32) -> (i32, i32) {
    %c0_i32 = arith.constant 0 : i32
    %c0_i32_0 = arith.constant 0 : i32
    %c0_i32_1 = arith.constant 0 : i32
    return %c0_i32, %c0_i32_0 : i32, i32
  }
  func.func @transform_4(%arg0: i32, %arg1: i32) -> (i32, i32, i32, i32) {
    %c0_i32 = arith.constant 0 : i32
    %c0_i32_0 = arith.constant 0 : i32
    %c0_i32_1 = arith.constant 0 : i32
    return %c0_i32, %arg0, %c0_i32_0, %arg1 : i32, i32, i32, i32
  }
}

</mosaic_0001>

<llo_original>
// kernel: tpu_custom_call.1
$region0: #{tpu_custom_call.1}
  #allocation0 [shape = 'u32[]', space=smem, size = 0x4, offset = 0x4, fixed_abs, tag = 'smem constant byte address 0x4 - core index']
  #allocation1 [shape = 'u32[72,128]{1,0:T(1,128)}', space=vmem, size = 0x9000, scoped, tag = 'internal scratch']
  #allocation2 [shape = 'f32[4,256]{1,0:T(4,128)}', space=vmem, size = 0x1000, scoped, tag = 'scratch operand']
  %s0 = inlined_call_operand.vmem [shape: f32[2,4,256], index: 0, kind: input, shape index: {}]
  %s1 = inlined_call_operand.vmem [shape: f32[2,4,256], index: 1, kind: input, shape index: {}]
  %s2 = inlined_call_operand.vmem [shape: f32[3,2,3,2], index: 2, kind: input, shape index: {}]
  %s3 = inlined_call_operand.vmem [shape: f32[6,1], index: 3, kind: input, shape index: {}]
  %s4 = inlined_call_operand.vmem [shape: f32[2,2,6,128], index: 4, kind: output, shape index: {}]
  %s5 = sld [smem:[#allocation0]]
  $region83: #{tpu_custom_call.1} parent=0
    _
  %s7 = ssub.s32 1, %s5
  %s8 = scalar_select 0, %s7, %s5
  $region1: #{tpu_custom_call.1} parent=0
    #allocation3 [shape = 'u8[16384]{0}', space=vmem, size = 0x4000, scoped, tag = 'output window, operand 0']
    loop: start=0, step=1, limit=4
    $region2: #{tpu_custom_call.1} parent=1 // loop_pre_header
      _
    $region3: #{tpu_custom_call.1} parent=1 // loop_header
      %s10 = sphi 0, %s14
      %p11 = scmp.ge.s32.totalorder %s10, 4
      %s17 = sphi 0, %s29
      %s18 = sphi 0, %s25
      %s19 = sphi 0, %s17
      %s20 = sphi 0, %s18
      %s21 = sphi 0, %s19
      %s22 = sphi 0, %s20
      %s34 = sphi 0, %s36
      %s37 = sphi 0, %s34
      %s38 = sphi 0, %s37
      %s54 = sphi 0, %s38
      %s64 = sphi 0, %s66
      %s67 = sphi 0, %s64
      %s68 = sphi 0, %s67
      %s84 = sphi 0, %s68
      %s88 = sphi 0, %s88
      %s90 = sphi 0, %s88
      %s91 = sphi 0, %s90
      %s105 = sphi 0, %s91
      %s109 = sphi 0, %s109
      %s111 = sphi 0, %s109
      %s112 = sphi 0, %s111
      %s126 = sphi 0, %s112
      %s134 = sphi 0, %s136
      %s137 = sphi 0, %s134
      %s138 = sphi 0, %s137
      %s154 = sphi 0, %s138
    $region4: #{tpu_custom_call.1} parent=1 // loop_header_branch
      %13 = sbr.rel (%p11) target = $region8
    $region5: #{tpu_custom_call.1} parent=1 // loop_body
      %s15 = ssub.s32 %s10, 1
      %s16 = ssub.s32 %s10, 2
      %s23 = sadd.s32 1, %s18
      %p24 = scmp.ge.s32.totalorder %s23, 1
      %s25 = scalar_select %p24, 0, %s23
      %s26 = sadd.s32 1, %s17
      %s27 = scalar_select %p24, %s26, %s17
      %p28 = scmp.ge.s32.totalorder %s27, 2
      %s29 = scalar_select %p28, 0, %s27
      %s30 = ssub.s32 %s17, %s29
      %s31 = ssub.s32 %s18, %s25
      %s32 = sor.u32 %s30, %s31
      %p33 = scmp.eq.s32.totalorder %s32, 0
      %s35 = sadd.s32 %s34, 1
      %s36 = scalar_select %p33, %s34, %s35
      %p39 = pneg %p33
      %p40 = scmp.eq.s32.totalorder %s10, 1
      %p41 = por %p39, %p40
      %p42 = scmp.ne.s32.totalorder %s34, %s37
      %p43 = scmp.eq.s32.totalorder %s10, 0
      %p44 = por %p42, %p43
      %p45 = scmp.ne.s32.totalorder %s34, %s37
      %p46 = scmp.eq.s32.totalorder %s15, 1
      %p47 = por %p45, %p46
      %p48 = scmp.ne.s32.totalorder %s37, %s38
      %p49 = scmp.eq.s32.totalorder %s15, 0
      %p50 = por %p48, %p49
      %p51 = scmp.ne.s32.totalorder %s37, %s38
      %p52 = scmp.eq.s32.totalorder %s16, 1
      %p53 = por %p51, %p52
      %p55 = scmp.ne.s32.totalorder %s38, %s54
      %p56 = scmp.eq.s32.totalorder %s16, 0
      %p57 = por %p55, %p56
      %s58 = sadd.s32 %s18, 1
      %s59 = sadd.s32 %s25, 1
      %s60 = ssub.s32 %s17, %s29
      %s61 = ssub.s32 %s58, %s59
      %s62 = sor.u32 %s60, %s61
      %p63 = scmp.eq.s32.totalorder %s62, 0
      %s65 = sadd.s32 %s64, 1
      %s66 = scalar_select %p63, %s64, %s65
      %p69 = pneg %p63
      %p70 = scmp.eq.s32.totalorder %s10, 1
      %p71 = por %p69, %p70
      %p72 = scmp.ne.s32.totalorder %s64, %s67
      %p73 = scmp.eq.s32.totalorder %s10, 0
      %p74 = por %p72, %p73
      %p75 = scmp.ne.s32.totalorder %s64, %s67
      %p76 = scmp.eq.s32.totalorder %s15, 1
      %p77 = por %p75, %p76
      %p78 = scmp.ne.s32.totalorder %s67, %s68
      %p79 = scmp.eq.s32.totalorder %s15, 0
      %p80 = por %p78, %p79
      %p81 = scmp.ne.s32.totalorder %s67, %s68
      %p82 = scmp.eq.s32.totalorder %s16, 1
      %p83 = por %p81, %p82
      %p85 = scmp.ne.s32.totalorder %s68, %s84
      %p86 = scmp.eq.s32.totalorder %s16, 0
      %p87 = por %p85, %p86
      %s89 = sadd.s32 %s88, 1
      %p92 = scmp.eq.s32.totalorder %s10, 1
      %p93 = scmp.ne.s32.totalorder %s88, %s90
      %p94 = scmp.eq.s32.totalorder %s10, 0
      %p95 = por %p93, %p94
      %p96 = scmp.ne.s32.totalorder %s88, %s90
      %p97 = scmp.eq.s32.totalorder %s15, 1
      %p98 = por %p96, %p97
      %p99 = scmp.ne.s32.totalorder %s90, %s91
      %p100 = scmp.eq.s32.totalorder %s15, 0
      %p101 = por %p99, %p100
      %p102 = scmp.ne.s32.totalorder %s90, %s91
      %p103 = scmp.eq.s32.totalorder %s16, 1
      %p104 = por %p102, %p103
      %p106 = scmp.ne.s32.totalorder %s91, %s105
      %p107 = scmp.eq.s32.totalorder %s16, 0
      %p108 = por %p106, %p107
      %s110 = sadd.s32 %s109, 1
      %p113 = scmp.eq.s32.totalorder %s10, 1
      %p114 = scmp.ne.s32.totalorder %s109, %s111
      %p115 = scmp.eq.s32.totalorder %s10, 0
      %p116 = por %p114, %p115
      %p117 = scmp.ne.s32.totalorder %s109, %s111
      %p118 = scmp.eq.s32.totalorder %s15, 1
      %p119 = por %p117, %p118
      %p120 = scmp.ne.s32.totalorder %s111, %s112
      %p121 = scmp.eq.s32.totalorder %s15, 0
      %p122 = por %p120, %p121
      %p123 = scmp.ne.s32.totalorder %s111, %s112
      %p124 = scmp.eq.s32.totalorder %s16, 1
      %p125 = por %p123, %p124
      %p127 = scmp.ne.s32.totalorder %s112, %s126
      %p128 = scmp.eq.s32.totalorder %s16, 0
      %p129 = por %p127, %p128
      %s130 = ssub.s32 %s17, %s29
      %s131 = ssub.s32 %s18, %s25
      %s132 = sor.u32 %s130, %s131
      %p133 = scmp.eq.s32.totalorder %s132, 0
      %s135 = sadd.s32 %s134, 1
      %s136 = scalar_select %p133, %s134, %s135
      %p139 = pneg %p133
      %p140 = scmp.eq.s32.totalorder %s10, 1
      %p141 = por %p139, %p140
      %p142 = scmp.ne.s32.totalorder %s134, %s137
      %p143 = scmp.eq.s32.totalorder %s10, 0
      %p144 = por %p142, %p143
      %p145 = scmp.ne.s32.totalorder %s134, %s137
      %p146 = scmp.eq.s32.totalorder %s15, 1
      %p147 = por %p145, %p146
      %p148 = scmp.ne.s32.totalorder %s137, %s138
      %p149 = scmp.eq.s32.totalorder %s15, 0
      %p150 = por %p148, %p149
      %p151 = scmp.ne.s32.totalorder %s137, %s138
      %p152 = scmp.eq.s32.totalorder %s16, 1
      %p153 = por %p151, %p152
      %p155 = scmp.ne.s32.totalorder %s138, %s154
      %p156 = scmp.eq.s32.totalorder %s16, 0
      %p157 = por %p155, %p156
      %p158 = scmp.le.s32.totalorder 1, %s10
      %p159 = scmp.lt.s32.totalorder %s10, 3
      %p160 = pnand %p158, %p159
      %p161 = pneg %p160
      // Predicated region
      $region9: #{tpu_custom_call.1} parent=5 // pred_check
        _
      $region10: #{tpu_custom_call.1} parent=5 // pred_check_branch
        %163 = sbr.rel (%p160) target = $region12
      $region11: #{tpu_custom_call.1} parent=5 // pred_region
        %s164 = ssub.s32 %s10, 1
        // Predicated region
        $region13: #{tpu_custom_call.1} parent=11 // pred_check
          %p165 = pneg %p101
        $region14: #{tpu_custom_call.1} parent=11 // pred_check_branch
          %167 = sbr.rel (%p165) target = $region16
        $region15: #{tpu_custom_call.1} parent=11 // pred_region
          _
        $region16: #{tpu_custom_call.1} parent=11 // pred_fallthru
          _
        // Predicated region
        $region17: #{tpu_custom_call.1} parent=11 // pred_check
          %p168 = pneg %p122
        $region18: #{tpu_custom_call.1} parent=11 // pred_check_branch
          %170 = sbr.rel (%p168) target = $region20
        $region19: #{tpu_custom_call.1} parent=11 // pred_region
          _
        $region20: #{tpu_custom_call.1} parent=11 // pred_fallthru
          _
      $region12: #{tpu_custom_call.1} parent=5 // pred_fallthru
        _
      %p171 = scmp.lt.s32.totalorder %s10, 2
      // Predicated region
      $region21: #{tpu_custom_call.1} parent=5 // pred_check
        %p172 = pneg %p171
      $region22: #{tpu_custom_call.1} parent=5 // pred_check_branch
        %174 = sbr.rel (%p172) target = $region24
      $region23: #{tpu_custom_call.1} parent=5 // pred_region
        // Predicated region
        $region25: #{tpu_custom_call.1} parent=23 // pred_check
          %p175 = pneg %p44
        $region26: #{tpu_custom_call.1} parent=23 // pred_check_branch
          %177 = sbr.rel (%p175) target = $region28
        $region27: #{tpu_custom_call.1} parent=23 // pred_region
          %p178 = scmp.lt.s32.totalorder %s17, 1
          %s179 = scalar_select %p178, %s17, 1
          %p180 = scmp.lt.s32.totalorder %s18, 1
          %s181 = scalar_select %p180, %s18, 1
          %s182 = smul.addr %s179, 2
          %s183 = sadd.s32 %s181, %s182
          %s184 = smul.addr %s183, 4
          %s185 = scalar_lea.vmem %s0, %s184
        $region28: #{tpu_custom_call.1} parent=23 // pred_fallthru
          _
        // Predicated region
        $region29: #{tpu_custom_call.1} parent=23 // pred_check
          %p186 = pneg %p74
        $region30: #{tpu_custom_call.1} parent=23 // pred_check_branch
          %188 = sbr.rel (%p186) target = $region32
        $region31: #{tpu_custom_call.1} parent=23 // pred_region
          %s189 = sadd.s32 %s18, 1
          %p190 = scmp.lt.s32.totalorder %s17, 1
          %s191 = scalar_select %p190, %s17, 1
          %p192 = scmp.lt.s32.totalorder %s189, 1
          %s193 = scalar_select %p192, %s189, 1
          %s194 = smul.addr %s191, 2
          %s195 = sadd.s32 %s193, %s194
          %s196 = smul.addr %s195, 4
          %s197 = scalar_lea.vmem %s1, %s196
          %s198 = sadd.s32 %s18, 1
        $region32: #{tpu_custom_call.1} parent=23 // pred_fallthru
          _
      $region24: #{tpu_custom_call.1} parent=5 // pred_fallthru
        _
      %p199 = scmp.le.s32.totalorder 1, %s10
      %p200 = scmp.lt.s32.totalorder %s10, 3
      %p201 = pnand %p199, %p200
      %p202 = pneg %p201
      // Predicated region
      $region33: #{tpu_custom_call.1} parent=5 // pred_check
        _
      $region34: #{tpu_custom_call.1} parent=5 // pred_check_branch
        %204 = sbr.rel (%p201) target = $region36
      $region35: #{tpu_custom_call.1} parent=5 // pred_region
        %s205 = ssub.s32 %s10, 1
        %p206 = scmp.lt.s32.totalorder %s19, 1
        %s207 = scalar_select %p206, %s19, 1
        %p208 = scmp.lt.s32.totalorder %s20, 1
        %s209 = scalar_select %p208, %s20, 1
        %s210 = smul.addr %s207, 2
        %s211 = sadd.s32 %s209, %s210
        %s212 = smul.addr %s211, 4
        %s213 = scalar_lea.vmem %s0, %s212
        %p214 = pneg %p50
        %p215 = pneg %p47
        %s216 = sadd.s32 %s20, 1
        %p217 = scmp.lt.s32.totalorder %s19, 1
        %s218 = scalar_select %p217, %s19, 1
        %p219 = scmp.lt.s32.totalorder %s216, 1
        %s220 = scalar_select %p219, %s216, 1
        %s221 = smul.addr %s218, 2
        %s222 = sadd.s32 %s220, %s221
        %s223 = smul.addr %s222, 4
        %s224 = scalar_lea.vmem %s1, %s223
        %p225 = pneg %p80
        %p226 = pneg %p77
        %p227 = pneg %p101
        %p228 = pneg %p98
        %p229 = pneg %p122
        %p230 = pneg %p119
        %p231 = pneg %p150
        %p232 = pneg %p147
        %s233 = sand.u32 %s137, 1
        %s234 = sand.u32 %s137, 1
        %s235 = smul.addr %s234, 16
        %s236 = scalar_lea.vmem [#allocation3], %s235
        %p237 = scmp.lt.s32.totalorder %s19, 1
        %s238 = scalar_select %p237, %s19, 1
        %p239 = scmp.lt.s32.totalorder %s20, 1
        %s240 = scalar_select %p239, %s20, 1
        %s241 = smul.addr %s238, 2
        %s242 = sadd.s32 %s240, %s241
        %s243 = smul.addr %s242, 4
        %s244 = scalar_lea.vmem %s0, %s243
        %s245 = sadd.s32 %s20, 1
        %p246 = scmp.lt.s32.totalorder %s19, 1
        %s247 = scalar_select %p246, %s19, 1
        %p248 = scmp.lt.s32.totalorder %s245, 1
        %s249 = scalar_select %p248, %s245, 1
        %s250 = smul.addr %s247, 2
        %s251 = sadd.s32 %s249, %s250
        %s252 = smul.addr %s251, 4
        %s253 = scalar_lea.vmem %s1, %s252
        %s254 = sadd.s32 %s20, 1
        %v255 = vld [vmem:[%s244] sm:$0xf]
        %256 = vst [vmem:[#allocation2] sm:$0xf] %v255
        %v257 = vld [vmem:[%s253] sm:$0xf]
        %258 = vst [vmem:[#allocation2 + $0x4] sm:$0xf] %v257
        %v259 = vld [vmem:[%s3] sm:$0x7]
        %261 = vset.pattern.permute.xlu0 0
        %262 = vperm.xlu0 %261, %v259
        %v263 = vpop.permute.xlu0 %262
        %v265 = vld [vmem:[%s3 + $0x3] sm:$0x7]
        %267 = vset.pattern.permute.xlu0 0
        %268 = vperm.xlu0 %267, %v265
        %v269 = vpop.permute.xlu0 %268
        %v270 = vrot.slane %v269, 5
        %vm272 = vcmask 1042432
        %v273 = vsel %vm272, %v263, %v270
        %274 = vst [vmem:[%s236] sm:$0x3f] %v273
        %v275 = vld [vmem:[%s3] sm:$0x7]
        %277 = vset.pattern.permute.xlu0 0
        %278 = vperm.xlu0 %277, %v275
        %v279 = vpop.permute.xlu0 %278
        %v281 = vld [vmem:[%s3 + $0x3] sm:$0x7]
        %283 = vset.pattern.permute.xlu0 0
        %284 = vperm.xlu0 %283, %v281
        %v285 = vpop.permute.xlu0 %284
        %v287 = vld [vmem:[#allocation2] sm:$0xff]
        %v288 = vld [vmem:[%s2] sm:$0x7]
        %290 = vst [vmem:[#allocation1] ss:$2 sm:$0xff] %v287
        %v291 = vld.sshfl [vmem:[#allocation1] sm:$0xff pattern:$0x75316420]
        %v292 = vld.sshfl [vmem:[#allocation1 + $0x8] sm:$0xff pattern:$0x75316420]
        %293 = vrot.lane.b32.xlu0 %v291, 126
        %v294 = vpop.permute.xlu0 %293
        %295 = vrot.lane.b32.xlu0 %v292, 126
        %v296 = vpop.permute.xlu0 %295
        %vm297 = vcmask 1031168
        %v298 = vsel %vm297, %v294, %v296
        %vm299 = vcmask 15360
        %v301 = vsel %vm299, %v288, 0
        %vm303 = vcmask 1041408
        %v304 = vsel %vm303, %v298, 0
        %306 = vmatpush.msra.mxu0 0.0
        %307 = vmatpush.msra.mxu0 0.0
        %308 = vmatpush.msra.mxu0 0.0
        %309 = vmatpush.msra.mxu0 0.0
        %310 = vmatpush.msra.mxu0 0.0
        %311 = vmatpush.msra.mxu0 0.0
        %312 = vmatpush.msra.mxu0 0.0
        %313 = vmatpush.msra.mxu0 0.0
        %314 = vmatpush.msra.mxu0 0.0
        %315 = vmatpush.msra.mxu0 0.0
        %316 = vmatpush.msra.mxu0 0.0
        %317 = vmatpush.msra.mxu0 0.0
        %318 = vmatpush.msra.mxu0 0.0
        %319 = vmatpush.msra.mxu0 0.0
        %320 = vmatpush.msra.mxu0 0.0
        %321 = vmatpush.msra.mxu0 %v304
        %322 = vmatmul.f32.gmra.mxu0 %v301
        %v323 = vpop.f32.mrf.mxu0
        %v324 = vadd.f32 0.0, %v323
        %325 = vdwg.mxu0
        %v326 = vadd.f32 %v279, %v324
        %s327 = scalar_lea.vmem %s2, 4
        %v328 = vld [vmem:[%s327] sm:$0x7]
        %329 = vst [vmem:[#allocation1] ss:$2 sm:$0xff] %v287
        %v330 = vld.sshfl [vmem:[#allocation1] sm:$0xff pattern:$0x75316420]
        %v331 = vld.sshfl [vmem:[#allocation1 + $0x8] sm:$0xff pattern:$0x75316420]
        %v332 = vrot.slane %v330, 2
        %v333 = vrot.slane %v331, 2
        %334 = vrot.lane.b32.xlu0 %v332, 126
        %v335 = vpop.permute.xlu0 %334
        %336 = vrot.lane.b32.xlu0 %v333, 126
        %v337 = vpop.permute.xlu0 %336
        %v338 = vsel %vm297, %v335, %v337
        %v340 = vsel %vm299, %v328, 0
        %v342 = vsel %vm303, %v338, 0
        %344 = vmatpush.msra.mxu0 0.0
        %345 = vmatpush.msra.mxu0 0.0
        %346 = vmatpush.msra.mxu0 0.0
        %347 = vmatpush.msra.mxu0 0.0
        %348 = vmatpush.msra.mxu0 0.0
        %349 = vmatpush.msra.mxu0 0.0
        %350 = vmatpush.msra.mxu0 0.0
        %351 = vmatpush.msra.mxu0 0.0
        %352 = vmatpush.msra.mxu0 0.0
        %353 = vmatpush.msra.mxu0 0.0
        %354 = vmatpush.msra.mxu0 0.0
        %355 = vmatpush.msra.mxu0 0.0
        %356 = vmatpush.msra.mxu0 0.0
        %357 = vmatpush.msra.mxu0 0.0
        %358 = vmatpush.msra.mxu0 0.0
        %359 = vmatpush.msra.mxu0 %v342
        %360 = vmatmul.f32.gmra.mxu0 %v340
        %v361 = vpop.f32.mrf.mxu0
        %v362 = vadd.f32 0.0, %v361
        %363 = vdwg.mxu0
        %v364 = vadd.f32 %v285, %v362
        %v365 = vld [vmem:[#allocation2] sm:$0xff]
        %s366 = scalar_lea.vmem %s2, 8
        %v367 = vld [vmem:[%s366] sm:$0x7]
        %369 = vst [vmem:[#allocation1] ss:$2 sm:$0xff] %v365
        %v370 = vld.sshfl [vmem:[#allocation1] sm:$0xff pattern:$0x75316420]
        %v371 = vld.sshfl [vmem:[#allocation1 + $0x8] sm:$0xff pattern:$0x75316420]
        %372 = vrot.lane.b32.xlu0 %v370, 127
        %v373 = vpop.permute.xlu0 %372
        %374 = vrot.lane.b32.xlu0 %v371, 127
        %v375 = vpop.permute.xlu0 %374
        %vm376 = vcmask 1039360
        %v377 = vsel %vm376, %v373, %v375
        %v379 = vsel %vm299, %v367, 0
        %v381 = vsel %vm303, %v377, 0
        %383 = vmatpush.msra.mxu0 0.0
        %384 = vmatpush.msra.mxu0 0.0
        %385 = vmatpush.msra.mxu0 0.0
        %386 = vmatpush.msra.mxu0 0.0
        %387 = vmatpush.msra.mxu0 0.0
        %388 = vmatpush.msra.mxu0 0.0
        %389 = vmatpush.msra.mxu0 0.0
        %390 = vmatpush.msra.mxu0 0.0
        %391 = vmatpush.msra.mxu0 0.0
        %392 = vmatpush.msra.mxu0 0.0
        %393 = vmatpush.msra.mxu0 0.0
        %394 = vmatpush.msra.mxu0 0.0
        %395 = vmatpush.msra.mxu0 0.0
        %396 = vmatpush.msra.mxu0 0.0
        %397 = vmatpush.msra.mxu0 0.0
        %398 = vmatpush.msra.mxu0 %v381
        %399 = vmatmul.f32.gmra.mxu0 %v379
        %v400 = vpop.f32.mrf.mxu0
        %v401 = vadd.f32 0.0, %v400
        %402 = vdwg.mxu0
        %v403 = vadd.f32 %v326, %v401
        %s404 = scalar_lea.vmem %s2, 12
        %v405 = vld [vmem:[%s404] sm:$0x7]
        %406 = vst [vmem:[#allocation1] ss:$2 sm:$0xff] %v365
        %v407 = vld.sshfl [vmem:[#allocation1] sm:$0xff pattern:$0x75316420]
        %v408 = vld.sshfl [vmem:[#allocation1 + $0x8] sm:$0xff pattern:$0x75316420]
        %v409 = vrot.slane %v407, 2
        %v410 = vrot.slane %v408, 2
        %411 = vrot.lane.b32.xlu0 %v409, 127
        %v412 = vpop.permute.xlu0 %411
        %413 = vrot.lane.b32.xlu0 %v410, 127
        %v414 = vpop.permute.xlu0 %413
        %v415 = vsel %vm376, %v412, %v414
        %v417 = vsel %vm299, %v405, 0
        %v419 = vsel %vm303, %v415, 0
        %421 = vmatpush.msra.mxu0 0.0
        %422 = vmatpush.msra.mxu0 0.0
        %423 = vmatpush.msra.mxu0 0.0
        %424 = vmatpush.msra.mxu0 0.0
        %425 = vmatpush.msra.mxu0 0.0
        %426 = vmatpush.msra.mxu0 0.0
        %427 = vmatpush.msra.mxu0 0.0
        %428 = vmatpush.msra.mxu0 0.0
        %429 = vmatpush.msra.mxu0 0.0
        %430 = vmatpush.msra.mxu0 0.0
        %431 = vmatpush.msra.mxu0 0.0
        %432 = vmatpush.msra.mxu0 0.0
        %433 = vmatpush.msra.mxu0 0.0
        %434 = vmatpush.msra.mxu0 0.0
        %435 = vmatpush.msra.mxu0 0.0
        %436 = vmatpush.msra.mxu0 %v419
        %437 = vmatmul.f32.gmra.mxu0 %v417
        %v438 = vpop.f32.mrf.mxu0
        %v439 = vadd.f32 0.0, %v438
        %440 = vdwg.mxu0
        %v441 = vadd.f32 %v364, %v439
        %v442 = vld [vmem:[#allocation2] sm:$0xf]
        %s443 = scalar_lea.vmem %s2, 16
        %v444 = vld [vmem:[%s443] sm:$0x7]
        %v446 = vsel %vm299, %v444, 0
        %v449 = vsel %vm303, %v442, 0
        %451 = vmatpush.msra.mxu0 0.0
        %452 = vmatpush.msra.mxu0 0.0
        %453 = vmatpush.msra.mxu0 0.0
        %454 = vmatpush.msra.mxu0 0.0
        %455 = vmatpush.msra.mxu0 0.0
        %456 = vmatpush.msra.mxu0 0.0
        %457 = vmatpush.msra.mxu0 0.0
        %458 = vmatpush.msra.mxu0 0.0
        %459 = vmatpush.msra.mxu0 0.0
        %460 = vmatpush.msra.mxu0 0.0
        %461 = vmatpush.msra.mxu0 0.0
        %462 = vmatpush.msra.mxu0 0.0
        %463 = vmatpush.msra.mxu0 0.0
        %464 = vmatpush.msra.mxu0 0.0
        %465 = vmatpush.msra.mxu0 0.0
        %466 = vmatpush.msra.mxu0 %v449
        %467 = vmatmul.f32.gmra.mxu0 %v446
        %v468 = vpop.f32.mrf.mxu0
        %v469 = vadd.f32 0.0, %v468
        %470 = vdwg.mxu0
        %v471 = vadd.f32 %v403, %v469
        %s472 = scalar_lea.vmem %s2, 20
        %v473 = vld [vmem:[%s472] sm:$0x7]
        %474 = vst [vmem:[#allocation1] ss:$2 sm:$0xff] %v442
        %v475 = vld.sshfl [vmem:[#allocation1] sm:$0xff pattern:$0x75316420]
        %v476 = vrot.slane %v475, 2
        %v478 = vsel %vm299, %v473, 0
        %v480 = vsel %vm303, %v476, 0
        %482 = vmatpush.msra.mxu0 0.0
        %483 = vmatpush.msra.mxu0 0.0
        %484 = vmatpush.msra.mxu0 0.0
        %485 = vmatpush.msra.mxu0 0.0
        %486 = vmatpush.msra.mxu0 0.0
        %487 = vmatpush.msra.mxu0 0.0
        %488 = vmatpush.msra.mxu0 0.0
        %489 = vmatpush.msra.mxu0 0.0
        %490 = vmatpush.msra.mxu0 0.0
        %491 = vmatpush.msra.mxu0 0.0
        %492 = vmatpush.msra.mxu0 0.0
        %493 = vmatpush.msra.mxu0 0.0
        %494 = vmatpush.msra.mxu0 0.0
        %495 = vmatpush.msra.mxu0 0.0
        %496 = vmatpush.msra.mxu0 0.0
        %497 = vmatpush.msra.mxu0 %v480
        %498 = vmatmul.f32.gmra.mxu0 %v478
        %v499 = vpop.f32.mrf.mxu0
        %v500 = vadd.f32 0.0, %v499
        %501 = vdwg.mxu0
        %v502 = vadd.f32 %v441, %v500
        %v504 = vrot.slane %v502, 5
        %v506 = vsel %vm272, %v471, %v504
        %s507 = scalar_lea.vmem %s236, 8 [#allocation3]
        %508 = vst [vmem:[%s507] sm:$0x3f] %v506
        %s509 = sand.u32 %s137, 1
        %s510 = sand.u32 %s137, 1
        %s511 = smul.addr %s510, 16
        %s512 = scalar_lea.vmem [#allocation3], %s511
        // Predicated region
        $region37: #{tpu_custom_call.1} parent=35 // pred_check
          %p513 = pneg %p147
        $region38: #{tpu_custom_call.1} parent=35 // pred_check_branch
          %515 = sbr.rel (%p513) target = $region40
        $region39: #{tpu_custom_call.1} parent=35 // pred_region
          %s516 = sadd.s32 %s20, %s19
          %s517 = smul.addr %s516, 8
          %s518 = scalar_lea.vmem %s4, %s517
          // Predicated region
          $region41: #{tpu_custom_call.1} parent=39 // pred_check
            _
          $region42: #{tpu_custom_call.1} parent=39 // pred_check_branch
            %520 = sbr.rel (0) target = $region44
          $region43: #{tpu_custom_call.1} parent=39 // pred_region
            // Predicated region
            $region45: #{tpu_custom_call.1} parent=43 // pred_check
              _
            $region46: #{tpu_custom_call.1} parent=43 // pred_check_branch
              %522 = sbr.rel (0) target = $region48
            $region47: #{tpu_custom_call.1} parent=43 // pred_region
              // Predicated region
              $region60: #{tpu_custom_call.1} parent=47 // pred_check
                _
              $region61: #{tpu_custom_call.1} parent=47 // pred_check_branch
                %540 = sbr.rel (0) target = $region63
              $region62: #{tpu_custom_call.1} parent=47 // pred_region
                loop: start=0, step=1, limit=1
                $region64: #{tpu_custom_call.1} parent=62 // loop_pre_header
                  _
                $region65: #{tpu_custom_call.1} parent=62 // loop_header
                  %s542 = sphi 0, %s546
                  %p543 = scmp.ge.s32.totalorder %s542, 1
                  %s547 = sphi %s512, %s512
                  %s548 = sphi %s518, %s518
                $region66: #{tpu_custom_call.1} parent=62 // loop_header_branch
                  %545 = sbr.rel (%p543) target = $region70
                $region67: #{tpu_custom_call.1} parent=62 // loop_body
                  %v549 = vld [vmem:[%s547] sm:$0xff]
                  %550 = vst [vmem:[%s548] sm:$0xff] %v549
                  %v551 = vld [vmem:[%s547 + $0x8] sm:$0xff]
                  %552 = vst [vmem:[%s548 + $0x10] sm:$0xff] %v551
                $region68: #{tpu_custom_call.1} parent=62 // loop_footer
                  %s546 = sadd.s32 1, %s542
                $region69: #{tpu_custom_call.1} parent=62 // loop_footer_branch
                  %541 = sbr.rel target = $region65
                $region70: #{tpu_custom_call.1} parent=62 // loop_exit
                  _
              $region63: #{tpu_custom_call.1} parent=47 // pred_fallthru
                _
              // Predicated region
              $region71: #{tpu_custom_call.1} parent=47 // pred_check
                _
              $region72: #{tpu_custom_call.1} parent=47 // pred_check_branch
                %554 = sbr.rel target = $region74
              $region73: #{tpu_custom_call.1} parent=47 // pred_region
                _
              $region74: #{tpu_custom_call.1} parent=47 // pred_fallthru
                _
            $region48: #{tpu_custom_call.1} parent=43 // pred_fallthru
              _
            // Predicated region
            $region49: #{tpu_custom_call.1} parent=43 // pred_check
              _
            $region50: #{tpu_custom_call.1} parent=43 // pred_check_branch
              %524 = sbr.rel target = $region52
            $region51: #{tpu_custom_call.1} parent=43 // pred_region
              %s526 = ssub.s32 256, 1
              loop: start=0, step=1, limit=1
              $region53: #{tpu_custom_call.1} parent=51 // loop_pre_header
                _
              $region54: #{tpu_custom_call.1} parent=51 // loop_header
                %s528 = sphi 0, %s532
                %p529 = scmp.ge.s32.totalorder %s528, 1
                %s533 = sphi %s512, %s512
                %s534 = sphi %s518, %s518
              $region55: #{tpu_custom_call.1} parent=51 // loop_header_branch
                %531 = sbr.rel (%p529) target = $region59
              $region56: #{tpu_custom_call.1} parent=51 // loop_body
                %v535 = vld [vmem:[%s533] sm:%s526]
                %536 = vst [vmem:[%s534] sm:%s526] %v535
                %v537 = vld [vmem:[%s533 + $0x8] sm:%s526]
                %538 = vst [vmem:[%s534 + $0x10] sm:%s526] %v537
              $region57: #{tpu_custom_call.1} parent=51 // loop_footer
                %s532 = sadd.s32 1, %s528
              $region58: #{tpu_custom_call.1} parent=51 // loop_footer_branch
                %527 = sbr.rel target = $region54
              $region59: #{tpu_custom_call.1} parent=51 // loop_exit
                _
            $region52: #{tpu_custom_call.1} parent=43 // pred_fallthru
              _
          $region44: #{tpu_custom_call.1} parent=39 // pred_fallthru
            _
          %555 = vnop
        $region40: #{tpu_custom_call.1} parent=35 // pred_fallthru
          _
      $region36: #{tpu_custom_call.1} parent=5 // pred_fallthru
        _
      %p556 = scmp.le.s32.totalorder 2, %s10
      // Predicated region
      $region75: #{tpu_custom_call.1} parent=5 // pred_check
        %p557 = pneg %p556
      $region76: #{tpu_custom_call.1} parent=5 // pred_check_branch
        %559 = sbr.rel (%p557) target = $region78
      $region77: #{tpu_custom_call.1} parent=5 // pred_region
        %s560 = ssub.s32 %s10, 2
        // Predicated region
        $region79: #{tpu_custom_call.1} parent=77 // pred_check
          %p561 = pneg %p153
        $region80: #{tpu_custom_call.1} parent=77 // pred_check_branch
          %563 = sbr.rel (%p561) target = $region82
        $region81: #{tpu_custom_call.1} parent=77 // pred_region
          %s564 = sand.u32 %s138, 1
          %s565 = sand.u32 %s138, 1
          %s566 = smul.addr %s565, 16
          %s567 = scalar_lea.vmem [#allocation3], %s566
        $region82: #{tpu_custom_call.1} parent=77 // pred_fallthru
          _
      $region78: #{tpu_custom_call.1} parent=5 // pred_fallthru
        _
    $region6: #{tpu_custom_call.1} parent=1 // loop_footer
      %s14 = sadd.s32 1, %s10
    $region7: #{tpu_custom_call.1} parent=1 // loop_footer_branch
      %9 = sbr.rel target = $region3
    $region8: #{tpu_custom_call.1} parent=1 // loop_exit
      _

</llo_original>
